<compile_context>
chip_gen: v5e
topology: v5e:2x2
jax: 0.10.0
libtpu: 0.0.40
codegen_flags: <defaults>
</compile_context>

<pallas_src>
import functools

import jax
import jax.numpy as jnp
from jax import lax
from jax.experimental import pallas as pl
from jax.experimental.pallas import tpu as pltpu


def _round_up(v, m):
    return ((v + m - 1) // m) * m


def _vmem_capacity_bytes():
    try:
        info = pltpu.get_tpu_info()
        cap = getattr(info, "vmem_capacity_bytes", None)
        if cap:
            return int(cap)
    except Exception:
        pass
    return 64 << 20  # conservative fallback: v7x per-TensorCore VMEM


def _softargmax_kernel(x_ref, rhs_ref, o_ref, *scratch, nw, nwc, n_chunks, n_rhs):
    """x_ref: (TM, Nd); rhs_ref: (n_rhs, Nd, nwc); o_ref: (8, TM) f32."""
    w = pl.program_id(1)
    x = x_ref[...]

    # Window sums (xs) and label-weighted window sums (ys) for this chunk.
    xs = jnp.dot(x, rhs_ref[0], preferred_element_type=jnp.float32)      # (TM, nwc)
    ys = jnp.dot(x, rhs_ref[1], preferred_element_type=jnp.float32)      # (TM, nwc)
    if n_rhs == 3:  # 16-bit input: labels split hi/lo, accumulated in f32
        ys = ys + jnp.dot(x, rhs_ref[2], preferred_element_type=jnp.float32)

    col = None
    if n_chunks > 1 or nwc > 1:
        col = lax.broadcasted_iota(jnp.int32, xs.shape, 1)

    if n_chunks > 1:
        # Zero-padded window columns (>= nw) must never win the argmax.
        xs = jnp.where(col < nw - w * nwc, xs, -jnp.inf)

    cmax = jnp.max(xs, axis=-1, keepdims=True)                            # (TM, 1)
    if nwc == 1:
        ysel = ys
    else:
        # first occurrence of the max (torch.argmax tie-break), then gather ys
        idx = jnp.min(jnp.where(xs == cmax, col, nwc), axis=-1, keepdims=True)
        ysel = jnp.sum(jnp.where(col == idx, ys, 0.0), axis=-1, keepdims=True)

    def _store(num, den):
        res = num / (den + 1e-8)                                          # (TM, 1)
        row = res.reshape(1, res.shape[0])                                # lane-dense
        o_ref[...] = jnp.broadcast_to(row, o_ref.shape).astype(o_ref.dtype)

    if n_chunks == 1:
        _store(ysel, cmax)
    else:
        m_sc, y_sc = scratch

        @pl.when(w == 0)
        def _():
            m_sc[...] = cmax
            y_sc[...] = ysel

        @pl.when(w > 0)
        def _():
            upd = cmax > m_sc[...]  # strict: keep first occurrence across chunks
            m_sc[...] = jnp.where(upd, cmax, m_sc[...])
            y_sc[...] = jnp.where(upd, ysel, y_sc[...])

        @pl.when(w == n_chunks - 1)
        def _():
            _store(y_sc[...], m_sc[...])


@functools.partial(jax.jit, static_argnames=("kernel_size", "nw_chunk"))
def soft_argmax(x, labels, kernel_size=0, *, nw_chunk=None):
    """x: [B, C, Nd], labels: [Nd] -> [B, C]  (forward of SoftArgMax)."""
    B, C, Nd = x.shape
    k = int(kernel_size) if kernel_size and kernel_size > 0 else Nd
    nw = Nd // k  # avg_pool1d drops the trailing remainder
    if nw < 1:
        raise ValueError(f"kernel_size={kernel_size} larger than last dim {Nd}")
    M = B * C
    orig_dtype = x.dtype

    # ---- compute dtype: same-dtype MXU dots only (no mixed-precision upcast) ----
    if x.dtype in (jnp.bfloat16, jnp.float16):
        cdt = x.dtype
    elif x.dtype == jnp.float32:
        cdt = jnp.float32
    else:
        cdt = jnp.float32
        x = x.astype(cdt)
    isz = jnp.dtype(cdt).itemsize
    gran = 8 if isz >= 4 else (16 if isz == 2 else 32)  # sublane granularity

    # ---- window chunking (bounds the resident RHS for small kernel_size) ----
    n_rhs = 2 if cdt == jnp.float32 else 3
    if nw_chunk is not None:
        nwc = min(_round_up(int(nw_chunk), 128), _round_up(nw, 128))
        n_chunks = pl.cdiv(nw, nwc)
    else:
        rhs_resident = n_rhs * _round_up(Nd, gran) * _round_up(nw, 128) * isz
        if rhs_resident <= (4 << 20):
            nwc, n_chunks = nw, 1
        else:
            nwc = max(128, ((2 << 20) // max(n_rhs * Nd * isz, 1)) // 128 * 128)
            nwc = min(nwc, _round_up(nw, 128))
            n_chunks = pl.cdiv(nw, nwc)
    if n_chunks == 1:
        nwc = nw  # no padded window columns needed
    nw_cols = nwc * n_chunks

    # ---- host-side RHS: [pool | labels*pool]  (labels hi/lo split for 16-bit) ----
    win = jnp.arange(Nd, dtype=jnp.int32) // k
    cols = jnp.arange(nw_cols, dtype=jnp.int32)
    pool = ((win[:, None] == cols[None, :]) & (cols[None, :] < nw)).astype(jnp.float32)
    lab = labels.astype(jnp.float32)
    if n_rhs == 2:
        parts = [pool, lab[:, None] * pool]
    else:
        poolc = pool.astype(cdt)
        hi = lab.astype(cdt)
        lo = (lab - hi.astype(jnp.float32)).astype(cdt)
        parts = [poolc, hi[:, None] * poolc, lo[:, None] * poolc]
    rhs = jnp.stack([p.astype(cdt) for p in parts], axis=0)  # (n_rhs, Nd, nw_cols)

    x2 = x.reshape(M, Nd)  # free: row-major contiguous, no copy / no pad

    # ---- row-tile size from the real VMEM budget ----
    vmem_cap = _vmem_capacity_bytes()
    vmem_limit = min(int(vmem_cap * 0.70), 100 << 20)
    fixed = 2 * n_rhs * _round_up(Nd, gran) * _round_up(nwc, 128) * isz  # rhs (dbl buf)
    per_row = (2 * _round_up(Nd, 128) * isz          # double-buffered x tile
               + 6 * _round_up(nwc, 128) * 4          # f32 intermediates (xs/ys/...)
               + 64                                    # output block
               + (1024 if n_chunks > 1 else 0))        # scratch accumulators
    usable = max(int(vmem_limit * 0.85) - fixed - (1 << 20), per_row * gran)
    tm_cap = max(gran, (usable // per_row) // gran * gran)
    TM = min(tm_cap, _round_up(pl.cdiv(M, 2), gran))  # >=2 tiles when possible (v7x 2 TCs)
    if TM >= M:
        TM = M
    num_tiles = pl.cdiv(M, TM)

    scratch_shapes = []
    if n_chunks > 1:
        scratch_shapes = [pltpu.VMEM((TM, 1), jnp.float32),
                          pltpu.VMEM((TM, 1), jnp.float32)]

    kernel = functools.partial(_softargmax_kernel, nw=nw, nwc=nwc,
                               n_chunks=n_chunks, n_rhs=n_rhs)

    out = pl.pallas_call(
        kernel,
        out_shape=jax.ShapeDtypeStruct((num_tiles * 8, TM), jnp.float32),
        grid=(num_tiles, n_chunks),
        in_specs=[
            pl.BlockSpec((TM, Nd), lambda i, w: (i, 0)),
            pl.BlockSpec((n_rhs, Nd, nwc), lambda i, w: (0, 0, w)),
        ],
        out_specs=pl.BlockSpec((8, TM), lambda i, w: (i, 0)),
        scratch_shapes=scratch_shapes,
        compiler_params=pltpu.CompilerParams(
            dimension_semantics=("parallel", "arbitrary"),
            vmem_limit_bytes=vmem_limit),
        cost_estimate=pl.CostEstimate(
            flops=2 * M * Nd * nw_cols * n_rhs,
            transcendentals=0,
            bytes_accessed=(M * Nd * isz
                            + num_tiles * n_rhs * Nd * nw_cols * isz
                            + num_tiles * 8 * TM * 4)),
    )(x2, rhs)

    res = out.reshape(num_tiles, 8, TM)[:, 0, :].reshape(num_tiles * TM)[:M]
    return res.reshape(B, C).astype(orig_dtype)


def _soft_argmax_ref(x, labels, kernel_size=0):
    """Pure-JAX reference mirroring the PyTorch module."""
    B, C, Nd = x.shape
    k = kernel_size if kernel_size > 0 else Nd
    nw = Nd // k
    y = x * labels[None, None, :]
    xs = x[:, :, : nw * k].reshape(B, C, nw, k).sum(-1)
    ys = y[:, :, : nw * k].reshape(B, C, nw, k).sum(-1)
    ratio = ys / (xs + 1e-8)
    ind = jnp.argmax(xs, axis=-1)
    return jnp.take_along_axis(ratio, ind[..., None], axis=-1)[..., 0]


if __name__ == "__main__":
    key = jax.random.PRNGKey(0)
    k1, k2, k3 = jax.random.split(key, 3)

    # Case 1: default full-window soft-argmax + a windowed variant.
    B, C, Nd = 2, 4, 16
    x = jax.random.uniform(k1, (B, C, Nd), dtype=jnp.float32)
    labels = jnp.arange(Nd, dtype=jnp.float32)
    out_full = jax.block_until_ready(soft_argmax(x, labels, kernel_size=0))
    out_win = jax.block_until_ready(soft_argmax(x, labels, kernel_size=4))
    assert out_full.shape == (B, C) and out_win.shape == (B, C)
    assert jnp.allclose(out_full, _soft_argmax_ref(x, labels, 0), atol=1e-4, rtol=1e-4)
    assert jnp.allclose(out_win, _soft_argmax_ref(x, labels, 4), atol=1e-4, rtol=1e-4)

    # Case 2: ragged row count (M=15 -> 2 row tiles) + pooling remainder.
    B2, C2, Nd2 = 3, 5, 32
    x2 = jax.random.uniform(k2, (B2, C2, Nd2), dtype=jnp.float32)
    labels2 = jnp.arange(Nd2, dtype=jnp.float32)
    out2 = jax.block_until_ready(soft_argmax(x2, labels2, kernel_size=5))
    assert out2.shape == (B2, C2)
    assert jnp.allclose(out2, _soft_argmax_ref(x2, labels2, 5), atol=1e-4, rtol=1e-4)

    # Case 3: bf16 input (pure-bf16 MXU path with hi/lo label split).
    xb = x.astype(jnp.bfloat16)
    outb = jax.block_until_ready(soft_argmax(xb, labels, kernel_size=0))
    refb = _soft_argmax_ref(xb.astype(jnp.float32), labels, 0)
    assert outb.dtype == jnp.bfloat16
    assert jnp.allclose(outb.astype(jnp.float32), refb, atol=2e-2, rtol=2e-2)

    # Case 4: window-chunked path (nw > chunk) with padded-column masking,
    # plus the same inputs through the default resident-RHS path.
    B3, C3, Nd3 = 2, 3, 160
    x3 = jax.random.uniform(k3, (B3, C3, Nd3), dtype=jnp.float32)
    labels3 = jnp.arange(Nd3, dtype=jnp.float32)
    ref3 = _soft_argmax_ref(x3, labels3, 1)
    out3 = jax.block_until_ready(soft_argmax(x3, labels3, kernel_size=1, nw_chunk=128))
    assert out3.shape == (B3, C3)
    assert jnp.allclose(out3, ref3, atol=1e-3, rtol=1e-3)
    out3b = jax.block_until_ready(soft_argmax(x3, labels3, kernel_size=1))
    assert jnp.allclose(out3b, ref3, atol=1e-3, rtol=1e-3)

    print("KERNEL_OK")
</pallas_src>

<mosaic_0001>
module attributes {stable_mosaic.version = 11 : i64} {
  func.func @_softargmax_kernel(%arg0: i32, %arg1: i32, %arg2: memref<8x16xf32, #tpu.memory_space<vmem>>, %arg3: memref<2x16x1xf32, #tpu.memory_space<vmem>>, %arg4: memref<8x8xf32, #tpu.memory_space<vmem>>) attributes {dimension_semantics = [#tpu.dimension_semantics<parallel>, #tpu.dimension_semantics<arbitrary>], iteration_bounds = array<i64: 1, 1>, scalar_prefetch = 0 : i64, scratch_operands = 0 : i64, tpu.core_type = #tpu.core_type<tc>, window_params = [{transform_indices = @transform_0, window_bounds = array<i64: 8, 16>}, {transform_indices = @transform_1, window_bounds = array<i64: 2, 16, 1>}, {transform_indices = @transform_2, window_bounds = array<i64: 8, 8>}]} {
    %c0 = arith.constant 0 : index
    %c0_0 = arith.constant 0 : index
    %0 = vector.load %arg2[%c0, %c0_0] : memref<8x16xf32, #tpu.memory_space<vmem>>, vector<8x16xf32>
    %c0_1 = arith.constant 0 : index
    %c0_2 = arith.constant 0 : index
    %c0_3 = arith.constant 0 : index
    %1 = vector.load %arg3[%c0_1, %c0_2, %c0_3] : memref<2x16x1xf32, #tpu.memory_space<vmem>>, vector<1x16x1xf32>
    %2 = vector.shape_cast %1 : vector<1x16x1xf32> to vector<16x1xf32>
    %cst = arith.constant dense<0.000000e+00> : vector<8x1xf32>
    %3 = tpu.matmul %0, %2, %cst {dimension_numbers = #tpu.dot_dimension_numbers<[1], [0], [0], [1], [0, 0, 1, 1], [], []>} : vector<8x16xf32>, vector<16x1xf32>, vector<8x1xf32> -> vector<8x1xf32>
    %c1 = arith.constant 1 : index
    %c0_4 = arith.constant 0 : index
    %c0_5 = arith.constant 0 : index
    %4 = vector.load %arg3[%c1, %c0_4, %c0_5] : memref<2x16x1xf32, #tpu.memory_space<vmem>>, vector<1x16x1xf32>
    %5 = vector.shape_cast %4 : vector<1x16x1xf32> to vector<16x1xf32>
    %cst_6 = arith.constant dense<0.000000e+00> : vector<8x1xf32>
    %6 = tpu.matmul %0, %5, %cst_6 {dimension_numbers = #tpu.dot_dimension_numbers<[1], [0], [0], [1], [0, 0, 1, 1], [], []>} : vector<8x16xf32>, vector<16x1xf32>, vector<8x1xf32> -> vector<8x1xf32>
    %cst_7 = arith.constant dense<0xFF800000> : vector<8xf32>
    %7 = vector.multi_reduction <maximumf>, %3, %cst_7 [1] : vector<8x1xf32> to vector<8xf32>
    %8 = vector.shape_cast %7 : vector<8xf32> to vector<8x1xf32>
    %cst_8 = arith.constant 9.99999993E-9 : f32
    %9 = vector.broadcast %cst_8 : f32 to vector<8x1xf32>
    %10 = arith.addf %8, %9 : vector<8x1xf32>
    %11 = arith.divf %6, %10 : vector<8x1xf32>
    %12 = vector.shape_cast %11 : vector<8x1xf32> to vector<1x8xf32>
    %13 = vector.shape_cast %12 : vector<1x8xf32> to vector<1x8xf32>
    %14 = vector.broadcast %13 : vector<1x8xf32> to vector<8x8xf32>
    %c0_9 = arith.constant 0 : index
    %c0_10 = arith.constant 0 : index
    %15 = vector.load %arg4[%c0_9, %c0_10] : memref<8x8xf32, #tpu.memory_space<vmem>>, vector<8x8xf32>
    tpu.vector_store %arg4[%c0_9, %c0_10], %14 {strides = array<i32>} : memref<8x8xf32, #tpu.memory_space<vmem>>, vector<8x8xf32>,
    return
  }
  func.func @transform_0(%arg0: i32, %arg1: i32) -> (i32, i32) {
    %c0_i32 = arith.constant 0 : i32
    %c0_i32_0 = arith.constant 0 : i32
    return %arg0, %c0_i32 : i32, i32
  }
  func.func @transform_1(%arg0: i32, %arg1: i32) -> (i32, i32, i32) {
    %c0_i32 = arith.constant 0 : i32
    %c0_i32_0 = arith.constant 0 : i32
    %c0_i32_1 = arith.constant 0 : i32
    return %c0_i32, %c0_i32_0, %arg1 : i32, i32, i32
  }
  func.func @transform_2(%arg0: i32, %arg1: i32) -> (i32, i32) {
    %c0_i32 = arith.constant 0 : i32
    %c0_i32_0 = arith.constant 0 : i32
    return %arg0, %c0_i32 : i32, i32
  }
}

</mosaic_0001>

<llo_original>
// kernel: squeeze.1
$region0: #{squeeze.1}
  %s0 = inlined_call_operand.vmem [shape: f32[8], index: 0, kind: input, shape index: {}]
  %s1 = inlined_call_operand.hbm [shape: f32[2,4], index: 1, kind: output, shape index: {}]
  $region1: #{squeeze.1} parent=0
    #allocation0 [shape = 'u8[1024]{0}', space=vmem, size = 0x400, scoped, tag = 'operand span for operand 1']
    #allocation1 [shape = 's32[1]{0}', space=sflag, size = 0x4, scoped, tag = 'scoped memory for squeeze.1']
    #allocation2 [shape = 'u8[4096]{0}', space=vmem, size = 0x1000, scoped, tag = 'scoped mem for output reshape']
    #allocation3 [shape = 'u8[4096]{0}', space=vmem, size = 0x1000, scoped, tag = 'scoped mem for input reshape']
    %2 = vsyncpa [#allocation1], 0
    %s4 = ssub.s32 2, 1
    %v5 = vld [vmem:[%s0] sm:%s4]
    %6 = vst [vmem:[#allocation3] sm:%s4] %v5
    %v7 = vld [vmem:[#allocation3] sm:$0x1]
    %vm8 = vcmask 31744
    %9 = vst.msk [vmem:[#allocation2] sm:$0x1] %vm8, %v7
    %v10 = vld [vmem:[#allocation3] sm:$0x1]
    %11 = vrot.lane.b32.xlu0 %v10, 124
    %v12 = vpop.permute.xlu0 %11
    %vm13 = vcmask 31744
    %s14 = scalar_lea.vmem [#allocation2], 1
    %15 = vst.msk [vmem:[%s14] sm:$0x1] %vm13, %v12
    %s17 = ssub.s32 4, 1
    %v18 = vld [vmem:[#allocation2] sm:%s17]
    %s20 = ssub.s32 4, 1
    %21 = vst [vmem:[#allocation0] sm:%s20] %v18
    %23 = vsyncadd [#allocation1], 0
    %s25 = sshll.u32 [#allocation0], 4
    %s26 = int_to_ptr.vmem [resolvable:$true] %s25
    %s27 = sshll.u32 %s1, 4
    %s28 = int_to_ptr.hbm [resolvable:$true] %s27
    %30 = dma.vmem_to_hbm [thread:$0]  %s26, 32, %s28, [#allocation1]
    %32 = dma.done [#allocation1], 32
    %33 = vsyncpa [#allocation1], 1

// kernel: soft_argmax.1
$region0: #{soft_argmax.1}
  #allocation0 [shape = 'u32[]', space=smem, size = 0x4, offset = 0x4, fixed_abs, tag = 'smem constant byte address 0x4 - core index']
  #allocation1 [shape = 'u32[72,128]{1,0:T(1,128)}', space=vmem, size = 0x9000, scoped, tag = 'internal scratch']
  %s0 = inlined_call_operand.vmem [shape: f32[8,16], index: 0, kind: input, shape index: {}]
  %s1 = inlined_call_operand.vmem [shape: f32[2,16,1], index: 1, kind: input, shape index: {}]
  %s2 = inlined_call_operand.vmem [shape: f32[8,8], index: 2, kind: output, shape index: {}]
  %s3 = sld [smem:[#allocation0]]
  $region18: #{soft_argmax.1} parent=0
    _
  %s5 = ssub.s32 1, %s3
  %s6 = scalar_select 0, %s5, %s3
  // Predicated region
  $region2: #{soft_argmax.1} parent=0 // pred_check
    _
  $region3: #{soft_argmax.1} parent=0 // pred_check_branch
    %8 = sbr.rel (0) target = $region5
  $region4: #{soft_argmax.1} parent=0 // pred_region
    _
  $region5: #{soft_argmax.1} parent=0 // pred_fallthru
    _
  // Predicated region
  $region6: #{soft_argmax.1} parent=0 // pred_check
    _
  $region7: #{soft_argmax.1} parent=0 // pred_check_branch
    %10 = sbr.rel (0) target = $region9
  $region8: #{soft_argmax.1} parent=0 // pred_region
    _
  $region9: #{soft_argmax.1} parent=0 // pred_fallthru
    _
  %v11 = vld [vmem:[%s0] sm:$0xff]
  %v12 = vld [vmem:[%s1] sm:$0xff]
  %v13 = vld [vmem:[%s1 + $0x8] sm:$0xff]
  %s14 = scalar_lea.vmem %s1, 16
  %v15 = vld [vmem:[%s14] sm:$0xff]
  %v16 = vld [vmem:[%s14 + $0x8] sm:$0xff]
  %vm17 = vcmask 130048
  %v19 = vsel %vm17, %v11, 0
  %21 = vmatpush.msra.mxu0 0.0
  %22 = vmatpush.msra.mxu0 0.0
  %23 = vmatpush.msra.mxu0 0.0
  %24 = vmatpush.msra.mxu0 0.0
  %25 = vmatpush.msra.mxu0 0.0
  %26 = vmatpush.msra.mxu0 0.0
  %27 = vmatpush.msra.mxu0 0.0
  %28 = vmatpush.msra.mxu0 0.0
  %29 = vmatpush.msra.mxu0 0.0
  %30 = vmatpush.msra.mxu0 0.0
  %31 = vmatpush.msra.mxu0 0.0
  %32 = vmatpush.msra.mxu0 0.0
  %33 = vmatpush.msra.mxu0 0.0
  %34 = vmatpush.msra.mxu0 0.0
  %35 = vmatpush.msra.mxu0 %v16
  %36 = vmatpush.msra.mxu0 %v15
  %37 = vmatmul.f32.gmra.mxu0 %v19
  %v38 = vpop.f32.mrf.mxu0
  %v39 = vadd.f32 0.0, %v38
  %40 = vdwg.mxu0
  %41 = vmatpush.msra.mxu0 0.0
  %42 = vmatpush.msra.mxu0 0.0
  %43 = vmatpush.msra.mxu0 0.0
  %44 = vmatpush.msra.mxu0 0.0
  %45 = vmatpush.msra.mxu0 0.0
  %46 = vmatpush.msra.mxu0 0.0
  %47 = vmatpush.msra.mxu0 0.0
  %48 = vmatpush.msra.mxu0 0.0
  %49 = vmatpush.msra.mxu0 0.0
  %50 = vmatpush.msra.mxu0 0.0
  %51 = vmatpush.msra.mxu0 0.0
  %52 = vmatpush.msra.mxu0 0.0
  %53 = vmatpush.msra.mxu0 0.0
  %54 = vmatpush.msra.mxu0 0.0
  %55 = vmatpush.msra.mxu0 %v13
  %56 = vmatpush.msra.mxu0 %v12
  %57 = vmatmul.f32.gmra.mxu0 %v19
  %v58 = vpop.f32.mrf.mxu0
  %v59 = vadd.f32 1e-08, %v58
  %60 = vdwg.mxu0
  %v61 = vrcp.pop %v59
  %v62 = vmul.f32 %v59, %v61
  %v63 = vsub.f32 1.0, %v62
  %v64 = vmul.f32 %v61, %v63
  %v65 = vadd.f32 %v61, %v64
  %vm66 = vweird.f32 %v59
  %vm67 = vweird.f32 %v61
  %vm68 = vmor %vm66, %vm67
  %v69 = vsel %vm68, %v61, %v65
  %v70 = vand.u32 2147483647, %v59
  %vm71 = vcmp.eq.f32.partialorder %v70, 8.507059e+37
  %v72 = vand.u32 %v59, 2147483648
  %v73 = vor.u32 1.1754944e-38, %v72
  %v74 = vsel %vm71, %v73, %v69
  %v75 = vmul.f32 %v39, %v74
  %77 = vset.pattern.permute.xlu0 0
  %78 = vperm.xlu0 %77, %v75
  %v79 = vpop.permute.xlu0 %78
  %v80 = vlaneseq
  %v81 = vand.u32 %v80, 127
  %v82 = vperm.slane %v79, %v81
  %vm83 = vcmask 1042434
  %v84 = vsel %vm83, %v82, %v82
  %vm85 = vcmask 1043459
  %v86 = vsel %vm85, %v82, %v84
  %vm87 = vcmask 1044484
  %v88 = vsel %vm87, %v82, %v86
  %vm89 = vcmask 1045509
  %v90 = vsel %vm89, %v82, %v88
  %vm91 = vcmask 1046534
  %v92 = vsel %vm91, %v82, %v90
  %vm93 = vcmask 1047559
  %v94 = vsel %vm93, %v82, %v92
  %vm96 = vcmask 64512
  %97 = vst.msk [vmem:[%s2] sm:$0xff] %vm96, %v94
  // Predicated region
  $region10: #{soft_argmax.1} parent=0 // pred_check
    _
  $region11: #{soft_argmax.1} parent=0 // pred_check_branch
    %99 = sbr.rel (0) target = $region13
  $region12: #{soft_argmax.1} parent=0 // pred_region
    _
  $region13: #{soft_argmax.1} parent=0 // pred_fallthru
    _
  // Predicated region
  $region14: #{soft_argmax.1} parent=0 // pred_check
    _
  $region15: #{soft_argmax.1} parent=0 // pred_check_branch
    %101 = sbr.rel (0) target = $region17
  $region16: #{soft_argmax.1} parent=0 // pred_region
    _
  $region17: #{soft_argmax.1} parent=0 // pred_fallthru
    _

</llo_original>
